<compile_context>
chip_gen: v7x
topology: tpu7x:2x2x1
jax: 0.10.0
libtpu: 0.0.40
codegen_flags: <defaults>
</compile_context>

<pallas_src>
import jax
import jax.numpy as jnp
from jax.experimental import pallas as pl
from jax.experimental.pallas import tpu as pltpu


def _pca_inverse_kernel(x_ref, comp_ref, mean_ref, o_ref):
    # x_ref    : (TM, K)  VMEM tile of coefficients
    # comp_ref : (K, TN)  VMEM tile of PCA components (TN may be full D)
    # mean_ref : (1, TN)  mean, broadcast over rows
    # o_ref    : (TM, TN) output tile (lane-dense)
    acc = jnp.dot(x_ref[...], comp_ref[...], preferred_element_type=jnp.float32)
    o_ref[...] = (acc + mean_ref[...].astype(jnp.float32)).astype(o_ref.dtype)


def _round_up(a, b):
    return ((a + b - 1) // b) * b


def _tpu_vmem_capacity_bytes():
    try:
        cap = int(pltpu.get_tpu_info().vmem_capacity_bytes)
        if cap > 0:
            return cap
    except Exception:
        pass
    return 128 * 1024 * 1024  # v5e / v6e default


def _spec(shape, index_map, buffers=None):
    """BlockSpec, optionally with a reduced pipeline depth (Buffered(n))."""
    if buffers is not None and hasattr(pl, "Buffered"):
        try:
            return pl.BlockSpec(shape, index_map, pipeline_mode=pl.Buffered(buffers))
        except (TypeError, ValueError):
            pass
    return pl.BlockSpec(shape, index_map)


def pca_inverse_transform(
    x,
    components,
    mean,
    *,
    tm=None,
    tn=None,
    compute_dtype=None,   # e.g. jnp.bfloat16 (opt-in; accumulation stays fp32)
    out_dtype=None,       # defaults to x.dtype
    vmem_limit_bytes=None,
):
    """y = x @ components + mean, computed on-TPU via Pallas."""
    B, K = x.shape
    K2, D = components.shape
    assert K == K2, "x / components contraction-dim mismatch"
    assert mean.shape == (D,), "mean must have shape (D,)"

    out_dtype = x.dtype if out_dtype is None else jnp.dtype(out_dtype)

    if compute_dtype is not None:
        x_in = x.astype(compute_dtype)
        comp_in = components.astype(compute_dtype)
    else:
        x_in, comp_in = x, components
    mean2d = mean.reshape(1, D)

    e_x = jnp.dtype(x_in.dtype).itemsize
    e_c = jnp.dtype(comp_in.dtype).itemsize
    e_m = jnp.dtype(mean2d.dtype).itemsize
    e_o = jnp.dtype(out_dtype).itemsize

    # --- per-generation VMEM budget ------------------------------------------
    vmem_cap = _tpu_vmem_capacity_bytes()
    if vmem_limit_bytes is None:
        # Leave headroom below physical VMEM for compiler scratch/semaphores:
        # ~54 MiB on v7x (64 MiB physical), ~108 MiB on v5e/v6e (128 MiB).
        vmem_limit_bytes = min(int(0.85 * vmem_cap), vmem_cap - (8 << 20))
    vmem_limit_bytes = int(vmem_limit_bytes)
    budget = int(0.85 * vmem_limit_bytes)

    # Only v7x has 2 TensorCores per chip worth sharding the batch axis across;
    # identify it by its smaller (64 MiB) per-core VMEM.
    multi_tc = vmem_cap <= (64 << 20)

    # --- row tile selection (sublane-aligned, MXU-friendly) -------------------
    B8 = _round_up(B, 8)
    if tm is None:
        tm = 256
    tm = max(8, _round_up(min(tm, B8), 8))
    if multi_tc and B >= 16 and pl.cdiv(B, tm) < 2:
        tm = max(8, _round_up(pl.cdiv(B, 2), 8))
    n_b = pl.cdiv(B, tm)

    # --- path selection --------------------------------------------------------
    # Resident path: components + mean fully VMEM-resident, single-buffered
    # (constant index_map needs no double buffer); x rows stream (2 buffers);
    # output (tm, D) blocks double-buffered.
    resident_bytes = (2 * tm * K * e_x
                      + 1 * K * D * e_c
                      + 1 * D * e_m
                      + 2 * tm * D * e_o)
    use_resident = (tn is None) and (resident_bytes <= budget)

    if use_resident:
        grid = (n_b,)
        in_specs = [
            _spec((tm, K), lambda i: (i, 0)),
            _spec((K, D), lambda i: (0, 0), buffers=1),
            _spec((1, D), lambda i: (0, 0), buffers=1),
        ]
        out_specs = pl.BlockSpec((tm, D), lambda i: (i, 0))
        dim_sems = ("parallel",)
    else:
        # Components too large (or tn forced): tile D.
        tn_cap = min(_round_up(D, 128), 8192)

        # Prefer keeping x fully resident (constant index, single buffer) and
        # gridding only over D: every operand then hits HBM exactly once.
        def _need_xres(cand):
            return (1 * B * K * e_x + 2 * K * cand * e_c
                    + 2 * cand * e_m + 2 * B * cand * e_o)

        x_resident_ok = _need_xres(128) <= budget

        if x_resident_ok:
            if tn is None:
                tn = 128
                cand = 256
                while cand <= tn_cap:
                    if _need_xres(cand) <= budget:
                        tn = cand
                    cand += 128
            tn = max(128, _round_up(tn, 128))
            n_d = pl.cdiv(D, tn)
            grid = (n_d,)
            in_specs = [
                _spec((B, K), lambda j: (0, 0), buffers=1),
                _spec((K, tn), lambda j: (0, j)),
                _spec((1, tn), lambda j: (0, j)),
            ]
            out_specs = pl.BlockSpec((B, tn), lambda j: (0, j))
            dim_sems = ("parallel",)
        else:
            # 2-D grid.  components block is single-buffered (its index changes
            # only on the outer axis), which halves the VMEM it holds.
            def _need_2d(cand):
                return (2 * tm * K * e_x + 1 * K * cand * e_c
                        + 1 * cand * e_m + 2 * tm * cand * e_o)

            if tn is None:
                tn = 128
                cand = 256
                while cand <= tn_cap:
                    if _need_2d(cand) <= budget:
                        tn = cand
                    cand += 128
            tn = max(128, _round_up(tn, 128))
            n_d = pl.cdiv(D, tn)

            # Choose grid ordering so the *smaller* operand is the re-read one.
            x_refetch = B * K * e_x * max(n_d - 1, 0)
            c_refetch = K * D * e_c * max(n_b - 1, 0)
            if x_refetch <= c_refetch:
                # D outer, batch inner: components column block read once.
                grid = (n_d, n_b)
                in_specs = [
                    _spec((tm, K), lambda j, i: (i, 0)),
                    _spec((K, tn), lambda j, i: (0, j), buffers=1),
                    _spec((1, tn), lambda j, i: (0, j), buffers=1),
                ]
                out_specs = pl.BlockSpec((tm, tn), lambda j, i: (i, j))
            else:
                # batch outer, D inner: x row block read once.
                grid = (n_b, n_d)
                in_specs = [
                    _spec((tm, K), lambda i, j: (i, 0), buffers=1),
                    _spec((K, tn), lambda i, j: (0, j)),
                    _spec((1, tn), lambda i, j: (0, j)),
                ]
                out_specs = pl.BlockSpec((tm, tn), lambda i, j: (i, j))
            dim_sems = ("parallel", "parallel")

    cost = pl.CostEstimate(
        flops=2 * B * K * D,
        transcendentals=0,
        bytes_accessed=B * K * e_x + K * D * e_c + D * e_m + B * D * e_o,
    )

    return pl.pallas_call(
        _pca_inverse_kernel,
        out_shape=jax.ShapeDtypeStruct((B, D), out_dtype),
        grid_spec=pltpu.PrefetchScalarGridSpec(
            num_scalar_prefetch=0,
            grid=grid,
            in_specs=in_specs,
            out_specs=out_specs,
        ),
        compiler_params=pltpu.CompilerParams(
            dimension_semantics=dim_sems,
            vmem_limit_bytes=vmem_limit_bytes,
        ),
        cost_estimate=cost,
    )(x_in, comp_in, mean2d)


if __name__ == "__main__":
    key = jax.random.PRNGKey(0)
    kx, kc, km = jax.random.split(key, 3)

    # Module-consistent small shapes: batch=16 rows of K=32 PCA coefficients,
    # D=256 reconstructed features.
    B, K, D = 16, 32, 256
    x = jax.random.normal(kx, (B, K), dtype=jnp.float32)
    components = jax.random.normal(kc, (K, D), dtype=jnp.float32) * 0.1
    mean = jax.random.normal(km, (D,), dtype=jnp.float32)
    y_ref = x @ components + mean

    # 1) default fp32 path (resident components) -- exact PyTorch semantics.
    y = pca_inverse_transform(x, components, mean)
    jax.block_until_ready(y)
    assert y.shape == (B, D) and y.dtype == x.dtype
    assert jnp.allclose(y, y_ref, atol=1e-4, rtol=1e-4), "fp32 mismatch vs reference"

    # 2) opt-in bf16 compute path (fp32 accumulation in-kernel): looser tolerance.
    y_bf = pca_inverse_transform(x, components, mean, compute_dtype=jnp.bfloat16)
    jax.block_until_ready(y_bf)
    assert jnp.allclose(y_bf, y_ref, atol=5e-2, rtol=5e-2), "bf16 mismatch vs reference"

    # 3) forced D-tiled path with non-multiple-of-128 D and non-multiple-of-8 B:
    #    exercises partial-block clipping (no wrapper padding anywhere).
    B2, D2 = 12, 200
    x2 = jax.random.normal(kx, (B2, K), dtype=jnp.float32)
    comp2 = jax.random.normal(kc, (K, D2), dtype=jnp.float32) * 0.1
    mean2 = jax.random.normal(km, (D2,), dtype=jnp.float32)
    y2 = pca_inverse_transform(x2, comp2, mean2, tn=128)
    jax.block_until_ready(y2)
    y2_ref = x2 @ comp2 + mean2
    assert jnp.allclose(y2, y2_ref, atol=1e-4, rtol=1e-4), "tiled-path mismatch vs reference"

    print("KERNEL_OK")
</pallas_src>

<mosaic_0001>
module attributes {stable_mosaic.version = 11 : i64} {
  func.func @_pca_inverse_kernel(%arg0: i32, %arg1: memref<16x32xf32, #tpu.memory_space<vmem>>, %arg2: memref<32x256xf32, #tpu.memory_space<vmem>>, %arg3: memref<1x256xf32, #tpu.memory_space<vmem>>, %arg4: memref<16x256xf32, #tpu.memory_space<vmem>>) attributes {dimension_semantics = [#tpu.dimension_semantics<parallel>], iteration_bounds = array<i64: 1>, scalar_prefetch = 0 : i64, scratch_operands = 0 : i64, tpu.core_type = #tpu.core_type<tc>, window_params = [{transform_indices = @transform_0, window_bounds = array<i64: 16, 32>}, {pipeline_mode = #tpu.pipeline_mode<synchronous>, transform_indices = @transform_1, window_bounds = array<i64: 32, 256>}, {pipeline_mode = #tpu.pipeline_mode<synchronous>, transform_indices = @transform_2, window_bounds = array<i64: 1, 256>}, {transform_indices = @transform_3, window_bounds = array<i64: 16, 256>}]} {
    %c0 = arith.constant 0 : index
    %c0_0 = arith.constant 0 : index
    %0 = vector.load %arg1[%c0, %c0_0] : memref<16x32xf32, #tpu.memory_space<vmem>>, vector<16x32xf32>
    %c0_1 = arith.constant 0 : index
    %c0_2 = arith.constant 0 : index
    %1 = vector.load %arg2[%c0_1, %c0_2] : memref<32x256xf32, #tpu.memory_space<vmem>>, vector<32x256xf32>
    %cst = arith.constant dense<0.000000e+00> : vector<16x256xf32>
    %2 = tpu.matmul %0, %1, %cst {dimension_numbers = #tpu.dot_dimension_numbers<[1], [0], [0], [1], [0, 0, 1, 1], [], []>} : vector<16x32xf32>, vector<32x256xf32>, vector<16x256xf32> -> vector<16x256xf32>
    %c0_3 = arith.constant 0 : index
    %c0_4 = arith.constant 0 : index
    %3 = vector.load %arg3[%c0_3, %c0_4] : memref<1x256xf32, #tpu.memory_space<vmem>>, vector<1x256xf32>
    %4 = vector.broadcast %3 : vector<1x256xf32> to vector<16x256xf32>
    %5 = arith.addf %2, %4 : vector<16x256xf32>
    %c0_5 = arith.constant 0 : index
    %c0_6 = arith.constant 0 : index
    %6 = vector.load %arg4[%c0_5, %c0_6] : memref<16x256xf32, #tpu.memory_space<vmem>>, vector<16x256xf32>
    tpu.vector_store %arg4[%c0_5, %c0_6], %5 {strides = array<i32>} : memref<16x256xf32, #tpu.memory_space<vmem>>, vector<16x256xf32>,
    return
  }
  func.func @transform_0(%arg0: i32) -> (i32, i32) {
    %c0_i32 = arith.constant 0 : i32
    %c0_i32_0 = arith.constant 0 : i32
    return %arg0, %c0_i32 : i32, i32
  }
  func.func @transform_1(%arg0: i32) -> (i32, i32) {
    %c0_i32 = arith.constant 0 : i32
    %c0_i32_0 = arith.constant 0 : i32
    %c0_i32_1 = arith.constant 0 : i32
    return %c0_i32, %c0_i32_0 : i32, i32
  }
  func.func @transform_2(%arg0: i32) -> (i32, i32) {
    %c0_i32 = arith.constant 0 : i32
    %c0_i32_0 = arith.constant 0 : i32
    %c0_i32_1 = arith.constant 0 : i32
    return %c0_i32, %c0_i32_0 : i32, i32
  }
  func.func @transform_3(%arg0: i32) -> (i32, i32) {
    %c0_i32 = arith.constant 0 : i32
    %c0_i32_0 = arith.constant 0 : i32
    return %arg0, %c0_i32 : i32, i32
  }
}

</mosaic_0001>

<llo_original>
// kernel: tpu_custom_call.1
$region0: #{tpu_custom_call.1}
  #allocation0 [shape = 'u32[]', space=smem, size = 0x4, offset = 0x4, fixed_abs, tag = 'smem constant byte address 0x4 - core index']
  #allocation1 [shape = 'u32[144,128]{1,0:T(1,128)}', space=vmem, size = 0x12000, scoped, tag = 'internal scratch']
  %s0 = inlined_call_operand.hbm [shape: f32[16,32], index: 0, kind: input, shape index: {}]
  %s1 = inlined_call_operand.hbm [shape: f32[32,256], index: 1, kind: input, shape index: {}]
  %s2 = inlined_call_operand.hbm [shape: f32[1,256], index: 2, kind: input, shape index: {}]
  %s3 = inlined_call_operand.hbm [shape: f32[16,256], index: 3, kind: output, shape index: {}]
  %s4 = sld [smem:[#allocation0]]
  $region34: #{tpu_custom_call.1} parent=0
    _
  %s6 = ssub.s32 1, %s4
  %s7 = scalar_select 0, %s6, %s4
  $region1: #{tpu_custom_call.1} parent=0
    #allocation2 [shape = 'u8[8192]{0}', space=vmem, size = 0x2000, scoped, tag = 'input window, operand 0, single buffered']
    #allocation3 [shape = 's32[1]{0}', space=sflag, size = 0x4, scoped, tag = 'scoped memory for tpu_custom_call.1']
    #allocation4 [shape = 's32[1]{0}', space=sflag, size = 0x4, scoped, tag = 'scoped memory for tpu_custom_call.1']
    #allocation5 [shape = 'u8[32768]{0}', space=vmem, size = 0x8000, scoped, tag = 'input window, operand 1, single buffered']
    #allocation6 [shape = 's32[1]{0}', space=sflag, size = 0x4, scoped, tag = 'scoped memory for tpu_custom_call.1']
    #allocation7 [shape = 'u8[1024]{0}', space=vmem, size = 0x400, scoped, tag = 'input window, operand 2, single buffered']
    #allocation8 [shape = 'u8[16384]{0}', space=vmem, size = 0x4000, scoped, tag = 'output window, operand 0, single buffered']
    %8 = vsyncpa [#allocation3], 0
    %9 = vsyncpa [#allocation6], 0
    %10 = vsyncpa [#allocation4], 0
    // Predicated region
    $region2: #{tpu_custom_call.1} parent=1 // pred_check
      _
    $region3: #{tpu_custom_call.1} parent=1 // pred_check_branch
      %12 = sbr.rel (0) target = $region5
    $region4: #{tpu_custom_call.1} parent=1 // pred_region
      %s14 = ssub.s32 256, 256
      %15 = vsyncadd [#allocation3], %s14
      %s16 = sshll.u32 [#allocation2], 4
      %s17 = int_to_ptr.vmem [resolvable:$true] %s16
      %22 = dma.hbm_to_vmem [thread:$0]  %s0, 256, %s17, [#allocation3], 128, 128, 8
    $region5: #{tpu_custom_call.1} parent=1 // pred_fallthru
      _
    // Predicated region
    $region6: #{tpu_custom_call.1} parent=1 // pred_check
      _
    $region7: #{tpu_custom_call.1} parent=1 // pred_check_branch
      %24 = sbr.rel (0) target = $region9
    $region8: #{tpu_custom_call.1} parent=1 // pred_region
      %s26 = ssub.s32 1024, 1024
      %27 = vsyncadd [#allocation6], %s26
      %s28 = sshll.u32 [#allocation5], 4
      %s29 = int_to_ptr.vmem [resolvable:$true] %s28
      %34 = dma.hbm_to_vmem [thread:$0]  %s1, 1024, %s29, [#allocation6], 256, 256, 16
    $region9: #{tpu_custom_call.1} parent=1 // pred_fallthru
      _
    // Predicated region
    $region10: #{tpu_custom_call.1} parent=1 // pred_check
      _
    $region11: #{tpu_custom_call.1} parent=1 // pred_check_branch
      %36 = sbr.rel (0) target = $region13
    $region12: #{tpu_custom_call.1} parent=1 // pred_region
      %s38 = ssub.s32 32, 32
      %39 = vsyncadd [#allocation6], %s38
      %s41 = sshll.u32 [#allocation7], 4
      %s42 = int_to_ptr.vmem [resolvable:$true] %s41
      %44 = dma.hbm_to_vmem [thread:$0]  %s2, 32, %s42, [#allocation6]
    $region13: #{tpu_custom_call.1} parent=1 // pred_fallthru
      _
    // Predicated region
    $region14: #{tpu_custom_call.1} parent=1 // pred_check
      _
    $region15: #{tpu_custom_call.1} parent=1 // pred_check_branch
      %46 = sbr.rel (0) target = $region17
    $region16: #{tpu_custom_call.1} parent=1 // pred_region
      %47 = dma.done [#allocation3], 256
    $region17: #{tpu_custom_call.1} parent=1 // pred_fallthru
      _
    // Predicated region
    $region18: #{tpu_custom_call.1} parent=1 // pred_check
      _
    $region19: #{tpu_custom_call.1} parent=1 // pred_check_branch
      %49 = sbr.rel (0) target = $region21
    $region20: #{tpu_custom_call.1} parent=1 // pred_region
      %50 = dma.done [#allocation6], 1024
    $region21: #{tpu_custom_call.1} parent=1 // pred_fallthru
      _
    // Predicated region
    $region22: #{tpu_custom_call.1} parent=1 // pred_check
      _
    $region23: #{tpu_custom_call.1} parent=1 // pred_check_branch
      %52 = sbr.rel (0) target = $region25
    $region24: #{tpu_custom_call.1} parent=1 // pred_region
      %53 = dma.done [#allocation6], 32
    $region25: #{tpu_custom_call.1} parent=1 // pred_fallthru
      _
    %v54 = vld [vmem:[#allocation2] sm:$0xff]
    %v55 = vld [vmem:[#allocation2 + $0x8] sm:$0xff]
    %v56 = vld [vmem:[#allocation5] sm:$0xff]
    %v57 = vld [vmem:[#allocation5 + $0x8] sm:$0xff]
    %v58 = vld [vmem:[#allocation5 + $0x10] sm:$0xff]
    %v59 = vld [vmem:[#allocation5 + $0x18] sm:$0xff]
    %v60 = vld [vmem:[#allocation5 + $0x20] sm:$0xff]
    %v61 = vld [vmem:[#allocation5 + $0x28] sm:$0xff]
    %v62 = vld [vmem:[#allocation5 + $0x30] sm:$0xff]
    %v63 = vld [vmem:[#allocation5 + $0x38] sm:$0xff]
    %v64 = vld [vmem:[#allocation7] sm:$0x3]
    %v66 = vlaneseq
    %v67 = vshrl.u32 %v66, 7
    %v68 = vsub.s32 0, %v67
    %v69 = vrot.slane %v64, %v68
    %v70 = vlaneseq
    %v71 = vshrl.u32 %v70, 7
    %v72 = vsub.s32 1, %v71
    %v73 = vrot.slane %v64, %v72
    %vm76 = vcmask 261120
    %v78 = vsel %vm76, %v54, 0
    %v81 = vsel %vm76, %v55, 0
    %83 = vmatprep.subr.mxu0 %v57
    %84 = vmatpush1.msra.mxu0 %v56
    %85 = vmatprep.subr.mxu0 %v59
    %86 = vmatpush1.msra.mxu0 %v58
    %87 = vmatprep.subr.mxu0 %v61
    %88 = vmatpush1.msra.mxu0 %v60
    %89 = vmatprep.subr.mxu0 %v63
    %90 = vmatpush1.msra.mxu0 %v62
    %91 = vmatprep.subr.mxu0 0.0
    %92 = vmatpush1.msra.mxu0 0.0
    %93 = vmatprep.subr.mxu0 0.0
    %94 = vmatpush1.msra.mxu0 0.0
    %95 = vmatprep.subr.mxu0 0.0
    %96 = vmatpush1.msra.mxu0 0.0
    %97 = vmatprep.subr.mxu0 0.0
    %98 = vmatpush1.msra.mxu0 0.0
    %99 = vmatprep.subr.mxu0 0.0
    %100 = vmatpush1.msra.mxu0 0.0
    %101 = vmatprep.subr.mxu0 0.0
    %102 = vmatpush1.msra.mxu0 0.0
    %103 = vmatprep.subr.mxu0 0.0
    %104 = vmatpush1.msra.mxu0 0.0
    %105 = vmatprep.subr.mxu0 0.0
    %106 = vmatpush1.msra.mxu0 0.0
    %107 = vmatprep.subr.mxu0 0.0
    %108 = vmatpush1.msra.mxu0 0.0
    %109 = vmatprep.subr.mxu0 0.0
    %110 = vmatpush1.msra.mxu0 0.0
    %111 = vmatprep.subr.mxu0 0.0
    %112 = vmatpush1.msra.mxu0 0.0
    %113 = vmatprep.subr.mxu0 0.0
    %114 = vmatpush1.msra.mxu0 0.0
    %115 = vmatprep.subr.mxu0 0.0
    %116 = vmatpush1.msra.mxu0 0.0
    %117 = vmatprep.subr.mxu0 0.0
    %118 = vmatpush1.msra.mxu0 0.0
    %119 = vmatprep.subr.mxu0 0.0
    %120 = vmatpush1.msra.mxu0 0.0
    %121 = vmatprep.subr.mxu0 0.0
    %122 = vmatpush1.msra.mxu0 0.0
    %123 = vmatprep.subr.mxu0 0.0
    %124 = vmatpush1.msra.mxu0 0.0
    %125 = vmatprep.subr.mxu0 0.0
    %126 = vmatpush1.msra.mxu0 0.0
    %127 = vmatprep.subr.mxu0 0.0
    %128 = vmatpush1.msra.mxu0 0.0
    %129 = vmatprep.subr.mxu0 0.0
    %130 = vmatpush1.msra.mxu0 0.0
    %131 = vmatprep.subr.mxu0 0.0
    %132 = vmatpush1.msra.mxu0 0.0
    %133 = vmatprep.subr.mxu0 0.0
    %134 = vmatpush1.msra.mxu0 0.0
    %135 = vmatprep.subr.mxu0 0.0
    %136 = vmatpush1.msra.mxu0 0.0
    %137 = vmatprep.subr.mxu0 0.0
    %138 = vmatpush1.msra.mxu0 0.0
    %139 = vmatprep.subr.mxu0 0.0
    %140 = vmatpush1.msra.mxu0 0.0
    %141 = vmatprep.subr.mxu0 0.0
    %142 = vmatpush1.msra.mxu0 0.0
    %143 = vmatprep.subr.mxu0 0.0
    %144 = vmatpush1.msra.mxu0 0.0
    %145 = vmatprep.subr.mxu0 0.0
    %146 = vmatpush1.msra.mxu0 0.0
    %147 = vmatprep.mubr.f32.mxu0 0.0
    %148 = vmatmul.mubr.f32.gmra.mrb[0].mxu0 %v78
    %v149 = vpop.f32.mrb[0].mxu0
    %v150 = vadd.f32 %v69, %v149
    %v151 = vpop.f32.mrb[0].mxu0
    %v152 = vadd.f32 %v73, %v151
    %153 = vmatprep.mubr.f32.mxu0 0.0
    %154 = vmatmul.mubr.f32.gmra.mrb[0].mxu0 %v81
    %v155 = vpop.f32.mrb[0].mxu0
    %v156 = vadd.f32 %v69, %v155
    %v157 = vpop.f32.mrb[0].mxu0
    %v158 = vadd.f32 %v73, %v157
    %159 = vdwg.mxu0
    %160 = vst [vmem:[#allocation8] sm:$0xff] %v150
    %161 = vst [vmem:[#allocation8 + $0x8] sm:$0xff] %v152
    %162 = vst [vmem:[#allocation8 + $0x10] sm:$0xff] %v156
    %163 = vst [vmem:[#allocation8 + $0x18] sm:$0xff] %v158
    // Predicated region
    $region26: #{tpu_custom_call.1} parent=1 // pred_check
      _
    $region27: #{tpu_custom_call.1} parent=1 // pred_check_branch
      %165 = sbr.rel (0) target = $region29
    $region28: #{tpu_custom_call.1} parent=1 // pred_region
      %s167 = ssub.s32 512, 512
      %168 = vsyncadd [#allocation4], %s167
      %s169 = sshll.u32 [#allocation8], 4
      %s170 = int_to_ptr.vmem [resolvable:$true] %s169
      %175 = dma.vmem_to_hbm [thread:$0]  %s170, 512, %s3, [#allocation4], 256, 256, 16
    $region29: #{tpu_custom_call.1} parent=1 // pred_fallthru
      _
    // Predicated region
    $region30: #{tpu_custom_call.1} parent=1 // pred_check
      _
    $region31: #{tpu_custom_call.1} parent=1 // pred_check_branch
      %177 = sbr.rel (0) target = $region33
    $region32: #{tpu_custom_call.1} parent=1 // pred_region
      %178 = dma.done [#allocation4], 512
    $region33: #{tpu_custom_call.1} parent=1 // pred_fallthru
      _
    %179 = vsyncpa [#allocation3], 1
    %180 = vsyncpa [#allocation6], 1
    %181 = vsyncpa [#allocation4], 1

</llo_original>
